<compile_context>
chip_gen: v5e
topology: v5e:2x2
jax: 0.10.0
libtpu: 0.0.40
codegen_flags: <defaults>
</compile_context>

<pallas_src>
import jax
import jax.numpy as jnp
from jax.experimental import pallas as pl
from jax.experimental.pallas import tpu as pltpu


def _standardize_kernel(x_ref, mean_ref, scale_ref, o_ref):
    # (x - mean) / scale, broadcasting (1, D) stats over (tile_rows, D) rows.
    x = x_ref[...].astype(jnp.float32)
    m = mean_ref[...].astype(jnp.float32)
    s = scale_ref[...].astype(jnp.float32)
    o_ref[...] = ((x - m) / s).astype(o_ref.dtype)


def standardization_forward(x, mean, scale, *, target_tile_bytes=4 * 1024 * 1024):
    """(x - mean) / scale elementwise via a row-tiled Pallas TPU kernel.

    x:     (B, D) float array.
    mean:  (D,) per-feature mean buffer.
    scale: (D,) per-feature std buffer.
    """
    B, D = x.shape
    itemsize = jnp.dtype(x.dtype).itemsize

    # Rows per tile: aim for ~target_tile_bytes per buffer, multiple of 8
    # (sublane constraint), at least 8, and collapse to a single full block
    # when the whole batch fits.
    rows = max(8, (target_tile_bytes // max(D * itemsize, 1)) // 8 * 8)
    tile_rows = B if rows >= B else rows

    grid = (pl.cdiv(B, tile_rows),)

    # Stats as (1, D) so their BlockSpec equals the full array dims.
    mean2 = jnp.reshape(mean, (1, D)).astype(x.dtype)
    scale2 = jnp.reshape(scale, (1, D)).astype(x.dtype)

    # Explicit VMEM budget: in + out tiles, double-buffered, + resident stats,
    # + headroom.  Capped safely under v7x's 64 MiB physical VMEM.
    tile_bytes = tile_rows * D * itemsize
    vmem_limit = 4 * tile_bytes + 4 * D * itemsize + (2 << 20)
    vmem_limit = int(min(max(vmem_limit, 8 << 20), 48 << 20))

    return pl.pallas_call(
        _standardize_kernel,
        out_shape=jax.ShapeDtypeStruct((B, D), x.dtype),
        grid_spec=pltpu.PrefetchScalarGridSpec(
            num_scalar_prefetch=0,
            grid=grid,
            in_specs=[
                pl.BlockSpec((tile_rows, D), lambda i: (i, 0)),   # x rows
                pl.BlockSpec((1, D), lambda i: (0, 0)),           # mean (resident)
                pl.BlockSpec((1, D), lambda i: (0, 0)),           # scale (resident)
            ],
            out_specs=pl.BlockSpec((tile_rows, D), lambda i: (i, 0)),
        ),
        compiler_params=pltpu.CompilerParams(
            dimension_semantics=("parallel",),
            vmem_limit_bytes=vmem_limit,
        ),
    )(x, mean2, scale2)


class StandardizationModuleJax:
    """Mirror of the PyTorch StandardizationModule (buffers: mean, scale)."""

    def __init__(self, mean, scale):
        self.mean = mean    # buffer: normalization_stats.x_mean, shape (D,)
        self.scale = scale  # buffer: normalization_stats.x_std,  shape (D,)

    def __call__(self, x):
        return standardization_forward(x, self.mean, self.scale)


if __name__ == "__main__":
    key = jax.random.PRNGKey(0)
    k_x, k_m, k_s = jax.random.split(key, 3)

    # Small demo shapes: batch=8, features=256.
    B, D = 8, 256
    x = jax.random.normal(k_x, (B, D), dtype=jnp.float32) * 3.0 + 1.0

    # Deterministic synthetic normalization statistics.
    mean = jax.random.normal(k_m, (D,), dtype=jnp.float32)
    scale = jnp.abs(jax.random.normal(k_s, (D,), dtype=jnp.float32)) + 0.1

    module = StandardizationModuleJax(mean, scale)
    out = module(x)
    out = jax.block_until_ready(out)

    # Sanity check against plain-JAX reference.
    ref = (x - mean[None, :]) / scale[None, :]
    assert out.shape == x.shape and out.dtype == x.dtype
    assert jnp.allclose(out, ref, atol=1e-6, rtol=1e-6)

    print("KERNEL_OK")
</pallas_src>

<mosaic_0001>
module attributes {stable_mosaic.version = 11 : i64} {
  func.func @_standardize_kernel(%arg0: i32, %arg1: memref<8x256xf32, #tpu.memory_space<vmem>>, %arg2: memref<1x256xf32, #tpu.memory_space<vmem>>, %arg3: memref<1x256xf32, #tpu.memory_space<vmem>>, %arg4: memref<8x256xf32, #tpu.memory_space<vmem>>) attributes {dimension_semantics = [#tpu.dimension_semantics<parallel>], iteration_bounds = array<i64: 1>, scalar_prefetch = 0 : i64, scratch_operands = 0 : i64, tpu.core_type = #tpu.core_type<tc>, window_params = [{transform_indices = @transform_0, window_bounds = array<i64: 8, 256>}, {pipeline_mode = #tpu.pipeline_mode<synchronous>, transform_indices = @transform_1, window_bounds = array<i64: 1, 256>}, {pipeline_mode = #tpu.pipeline_mode<synchronous>, transform_indices = @transform_2, window_bounds = array<i64: 1, 256>}, {transform_indices = @transform_3, window_bounds = array<i64: 8, 256>}]} {
    %c0 = arith.constant 0 : index
    %c0_0 = arith.constant 0 : index
    %0 = vector.load %arg1[%c0, %c0_0] : memref<8x256xf32, #tpu.memory_space<vmem>>, vector<8x256xf32>
    %c0_1 = arith.constant 0 : index
    %c0_2 = arith.constant 0 : index
    %1 = vector.load %arg2[%c0_1, %c0_2] : memref<1x256xf32, #tpu.memory_space<vmem>>, vector<1x256xf32>
    %c0_3 = arith.constant 0 : index
    %c0_4 = arith.constant 0 : index
    %2 = vector.load %arg3[%c0_3, %c0_4] : memref<1x256xf32, #tpu.memory_space<vmem>>, vector<1x256xf32>
    %3 = vector.broadcast %1 : vector<1x256xf32> to vector<8x256xf32>
    %4 = arith.subf %0, %3 : vector<8x256xf32>
    %5 = vector.broadcast %2 : vector<1x256xf32> to vector<8x256xf32>
    %6 = arith.divf %4, %5 : vector<8x256xf32>
    %c0_5 = arith.constant 0 : index
    %c0_6 = arith.constant 0 : index
    %7 = vector.load %arg4[%c0_5, %c0_6] : memref<8x256xf32, #tpu.memory_space<vmem>>, vector<8x256xf32>
    tpu.vector_store %arg4[%c0_5, %c0_6], %6 {strides = array<i32>} : memref<8x256xf32, #tpu.memory_space<vmem>>, vector<8x256xf32>,
    return
  }
  func.func @transform_0(%arg0: i32) -> (i32, i32) {
    %c0_i32 = arith.constant 0 : i32
    %c0_i32_0 = arith.constant 0 : i32
    return %arg0, %c0_i32 : i32, i32
  }
  func.func @transform_1(%arg0: i32) -> (i32, i32) {
    %c0_i32 = arith.constant 0 : i32
    %c0_i32_0 = arith.constant 0 : i32
    %c0_i32_1 = arith.constant 0 : i32
    return %c0_i32, %c0_i32_0 : i32, i32
  }
  func.func @transform_2(%arg0: i32) -> (i32, i32) {
    %c0_i32 = arith.constant 0 : i32
    %c0_i32_0 = arith.constant 0 : i32
    %c0_i32_1 = arith.constant 0 : i32
    return %c0_i32, %c0_i32_0 : i32, i32
  }
  func.func @transform_3(%arg0: i32) -> (i32, i32) {
    %c0_i32 = arith.constant 0 : i32
    %c0_i32_0 = arith.constant 0 : i32
    return %arg0, %c0_i32 : i32, i32
  }
}

</mosaic_0001>

<llo_original>
// kernel: tpu_custom_call.1
$region0: #{tpu_custom_call.1}
  #allocation0 [shape = 'u32[]', space=smem, size = 0x4, offset = 0x4, fixed_abs, tag = 'smem constant byte address 0x4 - core index']
  #allocation1 [shape = 'u32[72,128]{1,0:T(1,128)}', space=vmem, size = 0x9000, scoped, tag = 'internal scratch']
  %s0 = inlined_call_operand.hbm [shape: f32[8,256], index: 0, kind: input, shape index: {}]
  %s1 = inlined_call_operand.hbm [shape: f32[1,256], index: 1, kind: input, shape index: {}]
  %s2 = inlined_call_operand.hbm [shape: f32[1,256], index: 2, kind: input, shape index: {}]
  %s3 = inlined_call_operand.hbm [shape: f32[8,256], index: 3, kind: output, shape index: {}]
  %s4 = sld [smem:[#allocation0]]
  $region34: #{tpu_custom_call.1} parent=0
    _
  %s6 = ssub.s32 1, %s4
  %s7 = scalar_select 0, %s6, %s4
  $region1: #{tpu_custom_call.1} parent=0
    #allocation2 [shape = 'u8[8192]{0}', space=vmem, size = 0x2000, scoped, tag = 'input window, operand 0, single buffered']
    #allocation3 [shape = 's32[1]{0}', space=sflag, size = 0x4, scoped, tag = 'scoped memory for tpu_custom_call.1']
    #allocation4 [shape = 's32[1]{0}', space=sflag, size = 0x4, scoped, tag = 'scoped memory for tpu_custom_call.1']
    #allocation5 [shape = 'u8[1024]{0}', space=vmem, size = 0x400, scoped, tag = 'input window, operand 1, single buffered']
    #allocation6 [shape = 's32[1]{0}', space=sflag, size = 0x4, scoped, tag = 'scoped memory for tpu_custom_call.1']
    #allocation7 [shape = 'u8[1024]{0}', space=vmem, size = 0x400, scoped, tag = 'input window, operand 2, single buffered']
    #allocation8 [shape = 'u8[8192]{0}', space=vmem, size = 0x2000, scoped, tag = 'output window, operand 0, single buffered']
    %8 = vsyncpa [#allocation3], 0
    %9 = vsyncpa [#allocation6], 0
    %10 = vsyncpa [#allocation4], 0
    // Predicated region
    $region2: #{tpu_custom_call.1} parent=1 // pred_check
      _
    $region3: #{tpu_custom_call.1} parent=1 // pred_check_branch
      %12 = sbr.rel (0) target = $region5
    $region4: #{tpu_custom_call.1} parent=1 // pred_region
      %14 = vsyncadd [#allocation3], 0
      %s16 = sshll.u32 %s0, 4
      %s17 = int_to_ptr.hbm [resolvable:$true] %s16
      %s18 = sshll.u32 [#allocation2], 4
      %s19 = int_to_ptr.vmem [resolvable:$true] %s18
      %21 = dma.hbm_to_vmem [thread:$0]  %s17, 256, %s19, [#allocation3]
    $region5: #{tpu_custom_call.1} parent=1 // pred_fallthru
      _
    // Predicated region
    $region6: #{tpu_custom_call.1} parent=1 // pred_check
      _
    $region7: #{tpu_custom_call.1} parent=1 // pred_check_branch
      %23 = sbr.rel (0) target = $region9
    $region8: #{tpu_custom_call.1} parent=1 // pred_region
      %25 = vsyncadd [#allocation6], 0
      %s27 = sshll.u32 %s1, 4
      %s28 = int_to_ptr.hbm [resolvable:$true] %s27
      %s29 = sshll.u32 [#allocation5], 4
      %s30 = int_to_ptr.vmem [resolvable:$true] %s29
      %32 = dma.hbm_to_vmem [thread:$0]  %s28, 32, %s30, [#allocation6]
    $region9: #{tpu_custom_call.1} parent=1 // pred_fallthru
      _
    // Predicated region
    $region10: #{tpu_custom_call.1} parent=1 // pred_check
      _
    $region11: #{tpu_custom_call.1} parent=1 // pred_check_branch
      %34 = sbr.rel (0) target = $region13
    $region12: #{tpu_custom_call.1} parent=1 // pred_region
      %36 = vsyncadd [#allocation6], 0
      %s38 = sshll.u32 %s2, 4
      %s39 = int_to_ptr.hbm [resolvable:$true] %s38
      %s40 = sshll.u32 [#allocation7], 4
      %s41 = int_to_ptr.vmem [resolvable:$true] %s40
      %43 = dma.hbm_to_vmem [thread:$0]  %s39, 32, %s41, [#allocation6]
    $region13: #{tpu_custom_call.1} parent=1 // pred_fallthru
      _
    // Predicated region
    $region14: #{tpu_custom_call.1} parent=1 // pred_check
      _
    $region15: #{tpu_custom_call.1} parent=1 // pred_check_branch
      %45 = sbr.rel (0) target = $region17
    $region16: #{tpu_custom_call.1} parent=1 // pred_region
      %47 = dma.done [#allocation3], 256
    $region17: #{tpu_custom_call.1} parent=1 // pred_fallthru
      _
    // Predicated region
    $region18: #{tpu_custom_call.1} parent=1 // pred_check
      _
    $region19: #{tpu_custom_call.1} parent=1 // pred_check_branch
      %49 = sbr.rel (0) target = $region21
    $region20: #{tpu_custom_call.1} parent=1 // pred_region
      %51 = dma.done [#allocation6], 32
    $region21: #{tpu_custom_call.1} parent=1 // pred_fallthru
      _
    // Predicated region
    $region22: #{tpu_custom_call.1} parent=1 // pred_check
      _
    $region23: #{tpu_custom_call.1} parent=1 // pred_check_branch
      %53 = sbr.rel (0) target = $region25
    $region24: #{tpu_custom_call.1} parent=1 // pred_region
      %55 = dma.done [#allocation6], 32
    $region25: #{tpu_custom_call.1} parent=1 // pred_fallthru
      _
    %v56 = vld [vmem:[#allocation2] sm:$0xff]
    %v57 = vld [vmem:[#allocation2 + $0x8] sm:$0xff]
    %v58 = vld [vmem:[#allocation5] sm:$0x3]
    %v59 = vld [vmem:[#allocation7] sm:$0x3]
    %v61 = vperm.slane %v58, 0
    %v62 = vperm.slane %v58, 1
    %v65 = vsub.f32 %v56, %v61
    %v66 = vsub.f32 %v57, %v62
    %v68 = vperm.slane %v59, 0
    %v69 = vperm.slane %v59, 1
    %v72 = vrcp.pop %v68
    %v73 = vmul.f32 %v68, %v72
    %v74 = vsub.f32 1.0, %v73
    %v75 = vmul.f32 %v72, %v74
    %v76 = vadd.f32 %v72, %v75
    %vm77 = vweird.f32 %v68
    %vm78 = vweird.f32 %v72
    %vm79 = vmor %vm77, %vm78
    %v80 = vsel %vm79, %v72, %v76
    %v81 = vand.u32 2147483647, %v68
    %vm82 = vcmp.eq.f32.partialorder %v81, 8.507059e+37
    %v83 = vand.u32 %v68, 2147483648
    %v84 = vor.u32 1.1754944e-38, %v83
    %v85 = vsel %vm82, %v84, %v80
    %v86 = vmul.f32 %v65, %v85
    %v87 = vrcp.pop %v69
    %v88 = vmul.f32 %v69, %v87
    %v89 = vsub.f32 1.0, %v88
    %v90 = vmul.f32 %v87, %v89
    %v91 = vadd.f32 %v87, %v90
    %vm92 = vweird.f32 %v69
    %vm93 = vweird.f32 %v87
    %vm94 = vmor %vm92, %vm93
    %v95 = vsel %vm94, %v87, %v91
    %v96 = vand.u32 2147483647, %v69
    %vm97 = vcmp.eq.f32.partialorder %v96, 8.507059e+37
    %v98 = vand.u32 %v69, 2147483648
    %v99 = vor.u32 1.1754944e-38, %v98
    %v100 = vsel %vm97, %v99, %v95
    %v101 = vmul.f32 %v66, %v100
    %102 = vst [vmem:[#allocation8] sm:$0xff] %v86
    %103 = vst [vmem:[#allocation8 + $0x8] sm:$0xff] %v101
    // Predicated region
    $region26: #{tpu_custom_call.1} parent=1 // pred_check
      _
    $region27: #{tpu_custom_call.1} parent=1 // pred_check_branch
      %105 = sbr.rel (0) target = $region29
    $region28: #{tpu_custom_call.1} parent=1 // pred_region
      %107 = vsyncadd [#allocation4], 0
      %s109 = sshll.u32 [#allocation8], 4
      %s110 = int_to_ptr.vmem [resolvable:$true] %s109
      %s111 = sshll.u32 %s3, 4
      %s112 = int_to_ptr.hbm [resolvable:$true] %s111
      %114 = dma.vmem_to_hbm [thread:$0]  %s110, 256, %s112, [#allocation4]
    $region29: #{tpu_custom_call.1} parent=1 // pred_fallthru
      _
    // Predicated region
    $region30: #{tpu_custom_call.1} parent=1 // pred_check
      _
    $region31: #{tpu_custom_call.1} parent=1 // pred_check_branch
      %116 = sbr.rel (0) target = $region33
    $region32: #{tpu_custom_call.1} parent=1 // pred_region
      %118 = dma.done [#allocation4], 256
    $region33: #{tpu_custom_call.1} parent=1 // pred_fallthru
      _
    %119 = vsyncpa [#allocation3], 1
    %120 = vsyncpa [#allocation6], 1
    %121 = vsyncpa [#allocation4], 1

</llo_original>
